<compile_context>
chip_gen: v7x
topology: tpu7x:2x2x1
jax: 0.10.0
libtpu: 0.0.40
codegen_flags: <defaults>
</compile_context>

<pallas_src>
import functools

import jax
import jax.numpy as jnp
from jax.experimental import pallas as pl
from jax.experimental.pallas import tpu as pltpu

BN_EPS = 1e-5
LANE = 128


def _round_up(x, m):
    return ((x + m - 1) // m) * m


# ----------------------------------------------------------------------------- kernel
def mlp_kernel(x_ref, w1_ref, w2_ref, w3_ref, bias_ref, out_ref, *, h1, h2):
    """Fused: Linear+BN(folded)+Tanh -> Linear+BN(folded)+Tanh(+Dropout eval) -> Linear."""
    x = x_ref[...]

    # Static slices of the packed, lane-padded bias operand (zero runtime cost).
    b1 = bias_ref[0:1, 0:h1]          # [1, h1]
    b2 = bias_ref[1:2, 0:h2]          # [1, h2]
    b3 = bias_ref[2:3, :]             # [1, n_pad] (lane-dense)

    h = jnp.tanh(jnp.dot(x, w1_ref[...], preferred_element_type=jnp.float32) + b1)
    h = jnp.tanh(jnp.dot(h, w2_ref[...], preferred_element_type=jnp.float32) + b2)
    # TODO(synk): training-mode Dropout(0.5) (pltpu.prng_random_bits mask) not emitted;
    # eval mode = identity.
    out = jnp.dot(h, w3_ref[...], preferred_element_type=jnp.float32) + b3
    out_ref[...] = out.astype(out_ref.dtype)


# ----------------------------------------------------------------------------- wrapper
def mlp_forward(x, prep, *, batch_tile=512):
    """x: [B, input_size] f32. prep: output of prepare_params()."""
    w1, w2, w3, bias = prep["w1"], prep["w2"], prep["w3"], prep["bias"]
    B, in_size = x.shape
    h1 = w1.shape[1]
    h2 = w2.shape[1]
    n_pad = w3.shape[1]
    out_size = prep["out_size"]

    kernel = functools.partial(mlp_kernel, h1=h1, h2=h2)

    flops = 2 * B * (in_size * h1 + h1 * h2 + h2 * n_pad)
    trans = B * (h1 + h2)
    bytes_accessed = (
        sum(int(a.size) * a.dtype.itemsize for a in (x, w1, w2, w3, bias))
        + B * n_pad * 4
    )
    cost = pl.CostEstimate(
        flops=flops, transcendentals=trans, bytes_accessed=bytes_accessed
    )

    vmem = pltpu.MemorySpace.VMEM

    if B <= batch_tile:
        # Small batch: single invocation, whole-array VMEM operands (no grid, no
        # double-buffered pipeline machinery for a 1-step loop).
        out = pl.pallas_call(
            kernel,
            out_shape=jax.ShapeDtypeStruct((B, n_pad), jnp.float32),
            in_specs=[pl.BlockSpec(memory_space=vmem)] * 5,
            out_specs=pl.BlockSpec(memory_space=vmem),
            cost_estimate=cost,
        )(x, w1, w2, w3, bias)
        return out[:, :out_size]

    # Large batch: tile only the batch axis; weights/bias index_map -> (0, 0) so they
    # stay VMEM-resident across the grid; batch axis is "parallel" (megacore / v7x 2-TC).
    tb = batch_tile
    b_pad = _round_up(B, tb)
    if b_pad != B:
        x = jnp.pad(x, ((0, b_pad - B), (0, 0)))

    out = pl.pallas_call(
        kernel,
        out_shape=jax.ShapeDtypeStruct((b_pad, n_pad), jnp.float32),
        grid=(b_pad // tb,),
        in_specs=[
            pl.BlockSpec((tb, in_size), lambda i: (i, 0)),
            pl.BlockSpec((in_size, h1), lambda i: (0, 0)),
            pl.BlockSpec((h1, h2), lambda i: (0, 0)),
            pl.BlockSpec((h2, n_pad), lambda i: (0, 0)),
            pl.BlockSpec((3, n_pad), lambda i: (0, 0)),
        ],
        out_specs=pl.BlockSpec((tb, n_pad), lambda i: (i, 0)),
        compiler_params=pltpu.CompilerParams(dimension_semantics=("parallel",)),
        cost_estimate=cost,
    )(x, w1, w2, w3, bias)
    return out[:B, :out_size]


# ----------------------------------------------------------------------------- params
def init_raw_params(key, input_size, hidden_sizes, output_size):
    """PyTorch-equivalent raw parameters (weights stored [in, out]); nontrivial BN stats."""
    sizes = [input_size] + list(hidden_sizes) + [output_size]
    n_lin = len(sizes) - 1
    keys = jax.random.split(key, 2 * n_lin + 4 * len(hidden_sizes))
    params = {}
    ki = 0
    for idx, (fan_in, fan_out) in enumerate(zip(sizes[:-1], sizes[1:]), start=1):
        bound = 1.0 / (fan_in ** 0.5)
        params[f"w{idx}"] = jax.random.uniform(
            keys[ki], (fan_in, fan_out), jnp.float32, -bound, bound); ki += 1
        params[f"b{idx}"] = jax.random.uniform(
            keys[ki], (fan_out,), jnp.float32, -bound, bound); ki += 1
    for idx, h in enumerate(hidden_sizes, start=1):
        params[f"g{idx}"] = 1.0 + 0.1 * jax.random.normal(keys[ki], (h,), jnp.float32); ki += 1
        params[f"be{idx}"] = 0.1 * jax.random.normal(keys[ki], (h,), jnp.float32); ki += 1
        params[f"m{idx}"] = 0.1 * jax.random.normal(keys[ki], (h,), jnp.float32); ki += 1
        params[f"v{idx}"] = jnp.abs(1.0 + 0.1 * jax.random.normal(keys[ki], (h,), jnp.float32)); ki += 1
    return params


def prepare_params(raw, input_size, hidden_sizes, output_size):
    """One-time prep: fold eval-mode BN into W/b (in f32), pack biases, lane-pad output."""
    h1, h2 = hidden_sizes  # kernel is specialized for 2 hidden layers (as in the example)

    s1 = raw["g1"] * jax.lax.rsqrt(raw["v1"] + BN_EPS)
    w1 = raw["w1"] * s1[None, :]
    b1 = (raw["b1"] - raw["m1"]) * s1 + raw["be1"]

    s2 = raw["g2"] * jax.lax.rsqrt(raw["v2"] + BN_EPS)
    w2 = raw["w2"] * s2[None, :]
    b2 = (raw["b2"] - raw["m2"]) * s2 + raw["be2"]

    n_pad = _round_up(max(output_size, h1, h2, LANE), LANE)
    w3 = jnp.zeros((h2, n_pad), jnp.float32).at[:, :output_size].set(raw["w3"])

    bias = jnp.zeros((3, n_pad), jnp.float32)
    bias = bias.at[0, :h1].set(b1)
    bias = bias.at[1, :h2].set(b2)
    bias = bias.at[2, :output_size].set(raw["b3"])

    return {"w1": w1, "w2": w2, "w3": w3, "bias": bias, "out_size": output_size}


# ----------------------------------------------------------------------------- reference
def mlp_reference(x, raw):
    """Pure-JAX reference of the unfused eval-mode forward (from raw params)."""
    h = x @ raw["w1"] + raw["b1"]
    h = (h - raw["m1"]) * (raw["g1"] * jax.lax.rsqrt(raw["v1"] + BN_EPS)) + raw["be1"]
    h = jnp.tanh(h)
    h = h @ raw["w2"] + raw["b2"]
    h = (h - raw["m2"]) * (raw["g2"] * jax.lax.rsqrt(raw["v2"] + BN_EPS)) + raw["be2"]
    h = jnp.tanh(h)
    return h @ raw["w3"] + raw["b3"]


if __name__ == "__main__":
    key = jax.random.PRNGKey(0)
    k_x, k_p, k_xl = jax.random.split(key, 3)

    B, INPUT, HIDDEN, OUTPUT = 8, 16, [32, 32], 8
    raw = init_raw_params(k_p, INPUT, HIDDEN, OUTPUT)
    prep = prepare_params(raw, INPUT, HIDDEN, OUTPUT)

    # Small batch -> grid-less whole-array VMEM path.
    x = jax.random.normal(k_x, (B, INPUT), jnp.float32)
    out = jax.block_until_ready(mlp_forward(x, prep))
    ref = mlp_reference(x, raw)
    assert out.shape == (B, OUTPUT)
    assert jnp.allclose(out, ref, atol=1e-4, rtol=1e-4), "small-batch mismatch vs reference"

    # Larger batch -> batch-tiled "parallel" grid path (weights VMEM-resident).
    xb = jax.random.normal(k_xl, (520, INPUT), jnp.float32)
    outb = jax.block_until_ready(mlp_forward(xb, prep, batch_tile=128))
    refb = mlp_reference(xb, raw)
    assert outb.shape == (520, OUTPUT)
    assert jnp.allclose(outb, refb, atol=1e-4, rtol=1e-4), "tiled-batch mismatch vs reference"

    print("KERNEL_OK")
</pallas_src>

<mosaic_0001>
module attributes {stable_mosaic.version = 11 : i64} {
  func.func @mlp_kernel(%arg0: memref<8x16xf32, #tpu.memory_space<vmem>>, %arg1: memref<16x32xf32, #tpu.memory_space<vmem>>, %arg2: memref<32x32xf32, #tpu.memory_space<vmem>>, %arg3: memref<32x128xf32, #tpu.memory_space<vmem>>, %arg4: memref<3x128xf32, #tpu.memory_space<vmem>>, %arg5: memref<8x128xf32, #tpu.memory_space<vmem>>) attributes {dimension_semantics = [], scalar_prefetch = 0 : i64, scratch_operands = 0 : i64, tpu.core_type = #tpu.core_type<tc>} {
    %c0 = arith.constant 0 : index
    %c0_0 = arith.constant 0 : index
    %0 = vector.load %arg0[%c0, %c0_0] : memref<8x16xf32, #tpu.memory_space<vmem>>, vector<8x16xf32>
    %c0_1 = arith.constant 0 : index
    %c0_2 = arith.constant 0 : index
    %1 = vector.load %arg4[%c0_1, %c0_2] : memref<3x128xf32, #tpu.memory_space<vmem>>, vector<1x32xf32>
    %c1 = arith.constant 1 : index
    %c0_3 = arith.constant 0 : index
    %2 = vector.load %arg4[%c1, %c0_3] : memref<3x128xf32, #tpu.memory_space<vmem>>, vector<1x32xf32>
    %c2 = arith.constant 2 : index
    %c0_4 = arith.constant 0 : index
    %3 = vector.load %arg4[%c2, %c0_4] : memref<3x128xf32, #tpu.memory_space<vmem>>, vector<1x128xf32>
    %c0_5 = arith.constant 0 : index
    %c0_6 = arith.constant 0 : index
    %4 = vector.load %arg1[%c0_5, %c0_6] : memref<16x32xf32, #tpu.memory_space<vmem>>, vector<16x32xf32>
    %cst = arith.constant dense<0.000000e+00> : vector<8x32xf32>
    %5 = tpu.matmul %0, %4, %cst {dimension_numbers = #tpu.dot_dimension_numbers<[1], [0], [0], [1], [0, 0, 1, 1], [], []>} : vector<8x16xf32>, vector<16x32xf32>, vector<8x32xf32> -> vector<8x32xf32>
    %6 = vector.broadcast %1 : vector<1x32xf32> to vector<8x32xf32>
    %7 = arith.addf %5, %6 : vector<8x32xf32>
    %8 = math.tanh %7 : vector<8x32xf32>
    %c0_7 = arith.constant 0 : index
    %c0_8 = arith.constant 0 : index
    %9 = vector.load %arg2[%c0_7, %c0_8] : memref<32x32xf32, #tpu.memory_space<vmem>>, vector<32x32xf32>
    %cst_9 = arith.constant dense<0.000000e+00> : vector<8x32xf32>
    %10 = tpu.matmul %8, %9, %cst_9 {dimension_numbers = #tpu.dot_dimension_numbers<[1], [0], [0], [1], [0, 0, 1, 1], [], []>} : vector<8x32xf32>, vector<32x32xf32>, vector<8x32xf32> -> vector<8x32xf32>
    %11 = vector.broadcast %2 : vector<1x32xf32> to vector<8x32xf32>
    %12 = arith.addf %10, %11 : vector<8x32xf32>
    %13 = math.tanh %12 : vector<8x32xf32>
    %c0_10 = arith.constant 0 : index
    %c0_11 = arith.constant 0 : index
    %14 = vector.load %arg3[%c0_10, %c0_11] : memref<32x128xf32, #tpu.memory_space<vmem>>, vector<32x128xf32>
    %cst_12 = arith.constant dense<0.000000e+00> : vector<8x128xf32>
    %15 = tpu.matmul %13, %14, %cst_12 {dimension_numbers = #tpu.dot_dimension_numbers<[1], [0], [0], [1], [0, 0, 1, 1], [], []>} : vector<8x32xf32>, vector<32x128xf32>, vector<8x128xf32> -> vector<8x128xf32>
    %16 = vector.broadcast %3 : vector<1x128xf32> to vector<8x128xf32>
    %17 = arith.addf %15, %16 : vector<8x128xf32>
    %c0_13 = arith.constant 0 : index
    %c0_14 = arith.constant 0 : index
    %18 = vector.load %arg5[%c0_13, %c0_14] : memref<8x128xf32, #tpu.memory_space<vmem>>, vector<8x128xf32>
    tpu.vector_store %arg5[%c0_13, %c0_14], %17 {strides = array<i32>} : memref<8x128xf32, #tpu.memory_space<vmem>>, vector<8x128xf32>,
    return
  }
}

</mosaic_0001>

<llo_original>
// kernel: tpu_custom_call.1
$region0: #{tpu_custom_call.1}
  #allocation0 [shape = 'u32[]', space=smem, size = 0x4, offset = 0x4, fixed_abs, tag = 'smem constant byte address 0x4 - core index']
  #allocation1 [shape = 'u32[144,128]{1,0:T(1,128)}', space=vmem, size = 0x12000, scoped, tag = 'internal scratch']
  %s0 = inlined_call_operand.hbm [shape: f32[8,16], index: 0, kind: input, shape index: {}]
  %s1 = inlined_call_operand.hbm [shape: f32[16,32], index: 1, kind: input, shape index: {}]
  %s2 = inlined_call_operand.hbm [shape: f32[32,32], index: 2, kind: input, shape index: {}]
  %s3 = inlined_call_operand.hbm [shape: f32[32,128], index: 3, kind: input, shape index: {}]
  %s4 = inlined_call_operand.vmem [shape: f32[3,128], index: 4, kind: input, shape index: {}]
  %s5 = inlined_call_operand.hbm [shape: f32[8,128], index: 5, kind: output, shape index: {}]
  %s6 = sld [smem:[#allocation0]]
  $region46: #{tpu_custom_call.1} parent=0
    _
  %s8 = ssub.s32 1, %s6
  %s9 = scalar_select 0, %s8, %s6
  $region1: #{tpu_custom_call.1} parent=0
    #allocation2 [shape = 'u8[4096]{0}', space=vmem, size = 0x1000, scoped, tag = 'input window, operand 0, single buffered']
    #allocation3 [shape = 's32[1]{0}', space=sflag, size = 0x4, scoped, tag = 'scoped memory for tpu_custom_call.1']
    #allocation4 [shape = 's32[1]{0}', space=sflag, size = 0x4, scoped, tag = 'scoped memory for tpu_custom_call.1']
    #allocation5 [shape = 'u8[8192]{0}', space=vmem, size = 0x2000, scoped, tag = 'input window, operand 1, single buffered']
    #allocation6 [shape = 's32[1]{0}', space=sflag, size = 0x4, scoped, tag = 'scoped memory for tpu_custom_call.1']
    #allocation7 [shape = 'u8[16384]{0}', space=vmem, size = 0x4000, scoped, tag = 'input window, operand 2, single buffered']
    #allocation8 [shape = 'u8[16384]{0}', space=vmem, size = 0x4000, scoped, tag = 'input window, operand 3, single buffered']
    #allocation9 [shape = 's32[1]{0}', space=sflag, size = 0x4, scoped, tag = 'scoped memory for tpu_custom_call.1']
    #allocation10 [shape = 'u8[4096]{0}', space=vmem, size = 0x1000, scoped, tag = 'output window, operand 0, single buffered']
    %10 = vsyncpa [#allocation3], 0
    %11 = vsyncpa [#allocation6], 0
    %12 = vsyncpa [#allocation9], 0
    %13 = vsyncpa [#allocation4], 0
    // Predicated region
    $region2: #{tpu_custom_call.1} parent=1 // pred_check
      _
    $region3: #{tpu_custom_call.1} parent=1 // pred_check_branch
      %15 = sbr.rel (0) target = $region5
    $region4: #{tpu_custom_call.1} parent=1 // pred_region
      %s17 = ssub.s32 128, 128
      %18 = vsyncadd [#allocation3], %s17
      %s20 = sshll.u32 [#allocation2], 4
      %s21 = int_to_ptr.vmem [resolvable:$true] %s20
      %23 = dma.hbm_to_vmem [thread:$0]  %s0, 128, %s21, [#allocation3]
    $region5: #{tpu_custom_call.1} parent=1 // pred_fallthru
      _
    // Predicated region
    $region6: #{tpu_custom_call.1} parent=1 // pred_check
      _
    $region7: #{tpu_custom_call.1} parent=1 // pred_check_branch
      %25 = sbr.rel (0) target = $region9
    $region8: #{tpu_custom_call.1} parent=1 // pred_region
      %s27 = ssub.s32 256, 256
      %28 = vsyncadd [#allocation6], %s27
      %s29 = sshll.u32 [#allocation5], 4
      %s30 = int_to_ptr.vmem [resolvable:$true] %s29
      %35 = dma.hbm_to_vmem [thread:$0]  %s1, 256, %s30, [#allocation6], 128, 128, 8
    $region9: #{tpu_custom_call.1} parent=1 // pred_fallthru
      _
    // Predicated region
    $region10: #{tpu_custom_call.1} parent=1 // pred_check
      _
    $region11: #{tpu_custom_call.1} parent=1 // pred_check_branch
      %37 = sbr.rel (0) target = $region13
    $region12: #{tpu_custom_call.1} parent=1 // pred_region
      %s39 = ssub.s32 512, 512
      %40 = vsyncadd [#allocation6], %s39
      %s41 = sshll.u32 [#allocation7], 4
      %s42 = int_to_ptr.vmem [resolvable:$true] %s41
      %47 = dma.hbm_to_vmem [thread:$0]  %s2, 512, %s42, [#allocation6], 128, 128, 8
    $region13: #{tpu_custom_call.1} parent=1 // pred_fallthru
      _
    // Predicated region
    $region14: #{tpu_custom_call.1} parent=1 // pred_check
      _
    $region15: #{tpu_custom_call.1} parent=1 // pred_check_branch
      %49 = sbr.rel (0) target = $region17
    $region16: #{tpu_custom_call.1} parent=1 // pred_region
      %s51 = ssub.s32 512, 512
      %52 = vsyncadd [#allocation9], %s51
      %s53 = sshll.u32 [#allocation8], 4
      %s54 = int_to_ptr.vmem [resolvable:$true] %s53
      %59 = dma.hbm_to_vmem [thread:$0]  %s3, 512, %s54, [#allocation9], 128, 128, 8
    $region17: #{tpu_custom_call.1} parent=1 // pred_fallthru
      _
    // Predicated region
    $region18: #{tpu_custom_call.1} parent=1 // pred_check
      _
    $region19: #{tpu_custom_call.1} parent=1 // pred_check_branch
      %61 = sbr.rel (0) target = $region21
    $region20: #{tpu_custom_call.1} parent=1 // pred_region
      _
    $region21: #{tpu_custom_call.1} parent=1 // pred_fallthru
      _
    // Predicated region
    $region22: #{tpu_custom_call.1} parent=1 // pred_check
      _
    $region23: #{tpu_custom_call.1} parent=1 // pred_check_branch
      %63 = sbr.rel (0) target = $region25
    $region24: #{tpu_custom_call.1} parent=1 // pred_region
      %64 = dma.done [#allocation3], 128
    $region25: #{tpu_custom_call.1} parent=1 // pred_fallthru
      _
    // Predicated region
    $region26: #{tpu_custom_call.1} parent=1 // pred_check
      _
    $region27: #{tpu_custom_call.1} parent=1 // pred_check_branch
      %66 = sbr.rel (0) target = $region29
    $region28: #{tpu_custom_call.1} parent=1 // pred_region
      %67 = dma.done [#allocation6], 256
    $region29: #{tpu_custom_call.1} parent=1 // pred_fallthru
      _
    // Predicated region
    $region30: #{tpu_custom_call.1} parent=1 // pred_check
      _
    $region31: #{tpu_custom_call.1} parent=1 // pred_check_branch
      %69 = sbr.rel (0) target = $region33
    $region32: #{tpu_custom_call.1} parent=1 // pred_region
      %70 = dma.done [#allocation6], 512
    $region33: #{tpu_custom_call.1} parent=1 // pred_fallthru
      _
    // Predicated region
    $region34: #{tpu_custom_call.1} parent=1 // pred_check
      _
    $region35: #{tpu_custom_call.1} parent=1 // pred_check_branch
      %72 = sbr.rel (0) target = $region37
    $region36: #{tpu_custom_call.1} parent=1 // pred_region
      %73 = dma.done [#allocation9], 512
    $region37: #{tpu_custom_call.1} parent=1 // pred_fallthru
      _
    %v74 = vld [vmem:[#allocation2] sm:$0xff]
    %v75 = vld [vmem:[%s4] sm:$0x1]
    %v76 = vld [vmem:[%s4 + $0x1] sm:$0x1]
    %v77 = vld [vmem:[%s4 + $0x2] sm:$0x1]
    %v78 = vld [vmem:[#allocation5] sm:$0xff]
    %v79 = vld [vmem:[#allocation5 + $0x8] sm:$0xff]
    %v80 = vlaneseq
    %v81 = vshrl.u32 %v80, 7
    %v82 = vsub.s32 0, %v81
    %v83 = vrot.slane %v75, %v82
    %vm84 = vcmask 130048
    %v86 = vsel %vm84, %v74, 0
    %88 = vmatprep.subr.mxu0 0.0
    %89 = vmatpush1.msra.mxu0 %v78
    %90 = vmatprep.subr.mxu0 0.0
    %91 = vmatpush1.msra.mxu0 %v79
    %92 = vmatprep.subr.mxu0 0.0
    %93 = vmatpush1.msra.mxu0 0.0
    %94 = vmatprep.subr.mxu0 0.0
    %95 = vmatpush1.msra.mxu0 0.0
    %96 = vmatprep.subr.mxu0 0.0
    %97 = vmatpush1.msra.mxu0 0.0
    %98 = vmatprep.subr.mxu0 0.0
    %99 = vmatpush1.msra.mxu0 0.0
    %100 = vmatprep.subr.mxu0 0.0
    %101 = vmatpush1.msra.mxu0 0.0
    %102 = vmatprep.subr.mxu0 0.0
    %103 = vmatpush1.msra.mxu0 0.0
    %104 = vmatprep.subr.mxu0 0.0
    %105 = vmatpush1.msra.mxu0 0.0
    %106 = vmatprep.subr.mxu0 0.0
    %107 = vmatpush1.msra.mxu0 0.0
    %108 = vmatprep.subr.mxu0 0.0
    %109 = vmatpush1.msra.mxu0 0.0
    %110 = vmatprep.subr.mxu0 0.0
    %111 = vmatpush1.msra.mxu0 0.0
    %112 = vmatprep.subr.mxu0 0.0
    %113 = vmatpush1.msra.mxu0 0.0
    %114 = vmatprep.subr.mxu0 0.0
    %115 = vmatpush1.msra.mxu0 0.0
    %116 = vmatprep.subr.mxu0 0.0
    %117 = vmatpush1.msra.mxu0 0.0
    %118 = vmatprep.subr.mxu0 0.0
    %119 = vmatpush1.msra.mxu0 0.0
    %120 = vmatprep.subr.mxu0 0.0
    %121 = vmatpush1.msra.mxu0 0.0
    %122 = vmatprep.subr.mxu0 0.0
    %123 = vmatpush1.msra.mxu0 0.0
    %124 = vmatprep.subr.mxu0 0.0
    %125 = vmatpush1.msra.mxu0 0.0
    %126 = vmatprep.subr.mxu0 0.0
    %127 = vmatpush1.msra.mxu0 0.0
    %128 = vmatprep.subr.mxu0 0.0
    %129 = vmatpush1.msra.mxu0 0.0
    %130 = vmatprep.subr.mxu0 0.0
    %131 = vmatpush1.msra.mxu0 0.0
    %132 = vmatprep.subr.mxu0 0.0
    %133 = vmatpush1.msra.mxu0 0.0
    %134 = vmatprep.subr.mxu0 0.0
    %135 = vmatpush1.msra.mxu0 0.0
    %136 = vmatprep.subr.mxu0 0.0
    %137 = vmatpush1.msra.mxu0 0.0
    %138 = vmatprep.subr.mxu0 0.0
    %139 = vmatpush1.msra.mxu0 0.0
    %140 = vmatprep.subr.mxu0 0.0
    %141 = vmatpush1.msra.mxu0 0.0
    %142 = vmatprep.subr.mxu0 0.0
    %143 = vmatpush1.msra.mxu0 0.0
    %144 = vmatprep.subr.mxu0 0.0
    %145 = vmatpush1.msra.mxu0 0.0
    %146 = vmatprep.subr.mxu0 0.0
    %147 = vmatpush1.msra.mxu0 0.0
    %148 = vmatprep.subr.mxu0 0.0
    %149 = vmatpush1.msra.mxu0 0.0
    %150 = vmatprep.subr.mxu0 0.0
    %151 = vmatpush1.msra.mxu0 0.0
    %152 = vmatprep.mubr.f32.mxu0 0.0
    %153 = vmatmul.mubr.f32.gmra.mrb[0].mxu0 %v86
    %v154 = vpop.f32.mrb[0].mxu0
    %v155 = vadd.f32 %v83, %v154
    %v156 = vpop.f32.mrb[0].mxu0
    %157 = vdwg.mxu0
    %v158 = vtanh.pop %v155
    %v159 = vld [vmem:[#allocation7] sm:$0xff]
    %v160 = vld [vmem:[#allocation7 + $0x8] sm:$0xff]
    %v161 = vld [vmem:[#allocation7 + $0x10] sm:$0xff]
    %v162 = vld [vmem:[#allocation7 + $0x18] sm:$0xff]
    %v163 = vlaneseq
    %v164 = vshrl.u32 %v163, 7
    %v165 = vsub.s32 0, %v164
    %v166 = vrot.slane %v76, %v165
    %vm167 = vcmask 261120
    %v169 = vsel %vm167, %v158, 0
    %171 = vmatprep.subr.mxu0 0.0
    %172 = vmatpush1.msra.mxu0 %v159
    %173 = vmatprep.subr.mxu0 0.0
    %174 = vmatpush1.msra.mxu0 %v160
    %175 = vmatprep.subr.mxu0 0.0
    %176 = vmatpush1.msra.mxu0 %v161
    %177 = vmatprep.subr.mxu0 0.0
    %178 = vmatpush1.msra.mxu0 %v162
    %179 = vmatprep.subr.mxu0 0.0
    %180 = vmatpush1.msra.mxu0 0.0
    %181 = vmatprep.subr.mxu0 0.0
    %182 = vmatpush1.msra.mxu0 0.0
    %183 = vmatprep.subr.mxu0 0.0
    %184 = vmatpush1.msra.mxu0 0.0
    %185 = vmatprep.subr.mxu0 0.0
    %186 = vmatpush1.msra.mxu0 0.0
    %187 = vmatprep.subr.mxu0 0.0
    %188 = vmatpush1.msra.mxu0 0.0
    %189 = vmatprep.subr.mxu0 0.0
    %190 = vmatpush1.msra.mxu0 0.0
    %191 = vmatprep.subr.mxu0 0.0
    %192 = vmatpush1.msra.mxu0 0.0
    %193 = vmatprep.subr.mxu0 0.0
    %194 = vmatpush1.msra.mxu0 0.0
    %195 = vmatprep.subr.mxu0 0.0
    %196 = vmatpush1.msra.mxu0 0.0
    %197 = vmatprep.subr.mxu0 0.0
    %198 = vmatpush1.msra.mxu0 0.0
    %199 = vmatprep.subr.mxu0 0.0
    %200 = vmatpush1.msra.mxu0 0.0
    %201 = vmatprep.subr.mxu0 0.0
    %202 = vmatpush1.msra.mxu0 0.0
    %203 = vmatprep.subr.mxu0 0.0
    %204 = vmatpush1.msra.mxu0 0.0
    %205 = vmatprep.subr.mxu0 0.0
    %206 = vmatpush1.msra.mxu0 0.0
    %207 = vmatprep.subr.mxu0 0.0
    %208 = vmatpush1.msra.mxu0 0.0
    %209 = vmatprep.subr.mxu0 0.0
    %210 = vmatpush1.msra.mxu0 0.0
    %211 = vmatprep.subr.mxu0 0.0
    %212 = vmatpush1.msra.mxu0 0.0
    %213 = vmatprep.subr.mxu0 0.0
    %214 = vmatpush1.msra.mxu0 0.0
    %215 = vmatprep.subr.mxu0 0.0
    %216 = vmatpush1.msra.mxu0 0.0
    %217 = vmatprep.subr.mxu0 0.0
    %218 = vmatpush1.msra.mxu0 0.0
    %219 = vmatprep.subr.mxu0 0.0
    %220 = vmatpush1.msra.mxu0 0.0
    %221 = vmatprep.subr.mxu0 0.0
    %222 = vmatpush1.msra.mxu0 0.0
    %223 = vmatprep.subr.mxu0 0.0
    %224 = vmatpush1.msra.mxu0 0.0
    %225 = vmatprep.subr.mxu0 0.0
    %226 = vmatpush1.msra.mxu0 0.0
    %227 = vmatprep.subr.mxu0 0.0
    %228 = vmatpush1.msra.mxu0 0.0
    %229 = vmatprep.subr.mxu0 0.0
    %230 = vmatpush1.msra.mxu0 0.0
    %231 = vmatprep.subr.mxu0 0.0
    %232 = vmatpush1.msra.mxu0 0.0
    %233 = vmatprep.subr.mxu0 0.0
    %234 = vmatpush1.msra.mxu0 0.0
    %235 = vmatprep.mubr.f32.mxu0 0.0
    %236 = vmatmul.mubr.f32.gmra.mrb[0].mxu0 %v169
    %v237 = vpop.f32.mrb[0].mxu0
    %v238 = vadd.f32 %v166, %v237
    %v239 = vpop.f32.mrb[0].mxu0
    %240 = vdwg.mxu0
    %v241 = vtanh.pop %v238
    %v242 = vld [vmem:[#allocation8] sm:$0xff]
    %v243 = vld [vmem:[#allocation8 + $0x8] sm:$0xff]
    %v244 = vld [vmem:[#allocation8 + $0x10] sm:$0xff]
    %v245 = vld [vmem:[#allocation8 + $0x18] sm:$0xff]
    %v246 = vlaneseq
    %v247 = vshrl.u32 %v246, 7
    %v248 = vsub.s32 0, %v247
    %v249 = vrot.slane %v77, %v248
    %v251 = vsel %vm167, %v241, 0
    %253 = vmatprep.subr.mxu0 0.0
    %254 = vmatpush1.msra.mxu0 %v242
    %255 = vmatprep.subr.mxu0 0.0
    %256 = vmatpush1.msra.mxu0 %v243
    %257 = vmatprep.subr.mxu0 0.0
    %258 = vmatpush1.msra.mxu0 %v244
    %259 = vmatprep.subr.mxu0 0.0
    %260 = vmatpush1.msra.mxu0 %v245
    %261 = vmatprep.subr.mxu0 0.0
    %262 = vmatpush1.msra.mxu0 0.0
    %263 = vmatprep.subr.mxu0 0.0
    %264 = vmatpush1.msra.mxu0 0.0
    %265 = vmatprep.subr.mxu0 0.0
    %266 = vmatpush1.msra.mxu0 0.0
    %267 = vmatprep.subr.mxu0 0.0
    %268 = vmatpush1.msra.mxu0 0.0
    %269 = vmatprep.subr.mxu0 0.0
    %270 = vmatpush1.msra.mxu0 0.0
    %271 = vmatprep.subr.mxu0 0.0
    %272 = vmatpush1.msra.mxu0 0.0
    %273 = vmatprep.subr.mxu0 0.0
    %274 = vmatpush1.msra.mxu0 0.0
    %275 = vmatprep.subr.mxu0 0.0
    %276 = vmatpush1.msra.mxu0 0.0
    %277 = vmatprep.subr.mxu0 0.0
    %278 = vmatpush1.msra.mxu0 0.0
    %279 = vmatprep.subr.mxu0 0.0
    %280 = vmatpush1.msra.mxu0 0.0
    %281 = vmatprep.subr.mxu0 0.0
    %282 = vmatpush1.msra.mxu0 0.0
    %283 = vmatprep.subr.mxu0 0.0
    %284 = vmatpush1.msra.mxu0 0.0
    %285 = vmatprep.subr.mxu0 0.0
    %286 = vmatpush1.msra.mxu0 0.0
    %287 = vmatprep.subr.mxu0 0.0
    %288 = vmatpush1.msra.mxu0 0.0
    %289 = vmatprep.subr.mxu0 0.0
    %290 = vmatpush1.msra.mxu0 0.0
    %291 = vmatprep.subr.mxu0 0.0
    %292 = vmatpush1.msra.mxu0 0.0
    %293 = vmatprep.subr.mxu0 0.0
    %294 = vmatpush1.msra.mxu0 0.0
    %295 = vmatprep.subr.mxu0 0.0
    %296 = vmatpush1.msra.mxu0 0.0
    %297 = vmatprep.subr.mxu0 0.0
    %298 = vmatpush1.msra.mxu0 0.0
    %299 = vmatprep.subr.mxu0 0.0
    %300 = vmatpush1.msra.mxu0 0.0
    %301 = vmatprep.subr.mxu0 0.0
    %302 = vmatpush1.msra.mxu0 0.0
    %303 = vmatprep.subr.mxu0 0.0
    %304 = vmatpush1.msra.mxu0 0.0
    %305 = vmatprep.subr.mxu0 0.0
    %306 = vmatpush1.msra.mxu0 0.0
    %307 = vmatprep.subr.mxu0 0.0
    %308 = vmatpush1.msra.mxu0 0.0
    %309 = vmatprep.subr.mxu0 0.0
    %310 = vmatpush1.msra.mxu0 0.0
    %311 = vmatprep.subr.mxu0 0.0
    %312 = vmatpush1.msra.mxu0 0.0
    %313 = vmatprep.subr.mxu0 0.0
    %314 = vmatpush1.msra.mxu0 0.0
    %315 = vmatprep.subr.mxu0 0.0
    %316 = vmatpush1.msra.mxu0 0.0
    %317 = vmatprep.mubr.f32.mxu0 0.0
    %318 = vmatmul.mubr.f32.gmra.mrb[0].mxu0 %v251
    %v319 = vpop.f32.mrb[0].mxu0
    %v320 = vadd.f32 %v249, %v319
    %v321 = vpop.f32.mrb[0].mxu0
    %322 = vdwg.mxu0
    %323 = vst [vmem:[#allocation10] sm:$0xff] %v320
    // Predicated region
    $region38: #{tpu_custom_call.1} parent=1 // pred_check
      _
    $region39: #{tpu_custom_call.1} parent=1 // pred_check_branch
      %325 = sbr.rel (0) target = $region41
    $region40: #{tpu_custom_call.1} parent=1 // pred_region
      %s327 = ssub.s32 128, 128
      %328 = vsyncadd [#allocation4], %s327
      %s330 = sshll.u32 [#allocation10], 4
      %s331 = int_to_ptr.vmem [resolvable:$true] %s330
      %333 = dma.vmem_to_hbm [thread:$0]  %s331, 128, %s5, [#allocation4]
    $region41: #{tpu_custom_call.1} parent=1 // pred_fallthru
      _
    // Predicated region
    $region42: #{tpu_custom_call.1} parent=1 // pred_check
      _
    $region43: #{tpu_custom_call.1} parent=1 // pred_check_branch
      %335 = sbr.rel (0) target = $region45
    $region44: #{tpu_custom_call.1} parent=1 // pred_region
      %336 = dma.done [#allocation4], 128
    $region45: #{tpu_custom_call.1} parent=1 // pred_fallthru
      _
    %337 = vsyncpa [#allocation3], 1
    %338 = vsyncpa [#allocation6], 1
    %339 = vsyncpa [#allocation9], 1
    %340 = vsyncpa [#allocation4], 1

</llo_original>
